<compile_context>
chip_gen: v7x
topology: tpu7x:2x2x1
jax: 0.10.0
libtpu: 0.0.40
codegen_flags: <defaults>
</compile_context>

<pallas_src>
import jax
import jax.numpy as jnp
from jax.experimental import pallas as pl
from jax.experimental.pallas import tpu as pltpu


IN_DIM = 94
HID_DIM = 226
IN_PAD = 128      # 94  -> 128  (lane-dense)
HID_PAD = 256     # 226 -> 256  (lane-dense, matches 256-wide MXU contraction)
TN_MAX = 8192     # fc3 output tile (multiple of 128); 256*8192*2B*2buf ~ 8 MiB


def _round_up(x, m):
    return (x + m - 1) // m * m


def mynet_kernel(x_ref, w1_ref, b1_ref, w2_ref, b2_ref, w3_ref, b3_ref, o_ref):
    # h1/h2 are recomputed every grid step: the two small dots are <1 MFLOP on
    # an (8, 256) activation and are fully hidden under the (256, TN) w3 tile
    # DMA.  Recomputing (instead of a j==0-initialized scratch) makes every
    # grid step independent, so the axis can be "parallel" (v7x megacore).
    h1 = jnp.dot(x_ref[...], w1_ref[...], preferred_element_type=jnp.float32)
    h1 = jnp.maximum(h1 + b1_ref[...], 0.0)                      # fc1 + ReLU
    h2 = jnp.dot(h1.astype(jnp.bfloat16), w2_ref[...],
                 preferred_element_type=jnp.float32)
    h2 = (h2 + b2_ref[...]).astype(jnp.bfloat16)                 # fc2 (no act.)

    # fc3: one bf16 MXU dot per streamed contiguous (HID_PAD, TN) weight tile.
    h3 = jnp.dot(h2, w3_ref[...], preferred_element_type=jnp.float32)
    o_ref[...] = (h3 + b3_ref[...]).astype(o_ref.dtype)


def mynet_forward(x, w1, b1, w2, b2, w3, b3, *, tn_max=TN_MAX):
    """x: (B, 94) f32.  w*: (in, out) = PyTorch weight transposed.  b*: (out,)."""
    B = x.shape[0]
    out3 = w3.shape[1]

    B_pad = _round_up(B, 8)
    out3_128 = _round_up(out3, 128)
    tn = min(tn_max, out3_128)                 # multiple of 128 by construction
    n_tiles = pl.cdiv(out3_128, tn)
    out3_pad = n_tiles * tn

    def pad2(a, r, c, dtype):
        return jnp.pad(a, ((0, r - a.shape[0]), (0, c - a.shape[1]))).astype(dtype)

    # Zero-padding is exact: padded x cols / weight rows contribute 0 products,
    # padded output cols are 0 and are sliced away below.
    xp = pad2(x, B_pad, IN_PAD, jnp.bfloat16)
    w1p = pad2(w1, IN_PAD, HID_PAD, jnp.bfloat16)
    w2p = pad2(w2, HID_PAD, HID_PAD, jnp.bfloat16)
    b1p = pad2(b1.reshape(1, -1), 1, HID_PAD, jnp.float32)
    b2p = pad2(b2.reshape(1, -1), 1, HID_PAD, jnp.float32)
    b3p = pad2(b3.reshape(1, -1), 1, out3_pad, jnp.float32)

    # Pre-tile w3 so each streamed (HID_PAD, tn) block is contiguous in HBM:
    # w3t[j] == w3p[:, j*tn:(j+1)*tn]  ->  one linear DMA per grid step.
    w3p = pad2(w3, HID_PAD, out3_pad, jnp.bfloat16)
    w3t = w3p.reshape(HID_PAD, n_tiles, tn).transpose(1, 0, 2)

    const = lambda j: (0, 0)
    out_padded = pl.pallas_call(
        mynet_kernel,
        out_shape=jax.ShapeDtypeStruct((B_pad, out3_pad), jnp.float32),
        grid_spec=pltpu.PrefetchScalarGridSpec(
            num_scalar_prefetch=0,
            grid=(n_tiles,),
            in_specs=[
                pl.BlockSpec((B_pad, IN_PAD), const),              # x   (resident)
                pl.BlockSpec((IN_PAD, HID_PAD), const),            # w1  (resident)
                pl.BlockSpec((1, HID_PAD), const),                 # b1
                pl.BlockSpec((HID_PAD, HID_PAD), const),           # w2  (resident)
                pl.BlockSpec((1, HID_PAD), const),                 # b2
                pl.BlockSpec((None, HID_PAD, tn),
                             lambda j: (j, 0, 0)),                 # w3  (streamed, contiguous)
                pl.BlockSpec((1, tn), lambda j: (0, j)),           # b3  (streamed)
            ],
            out_specs=pl.BlockSpec((B_pad, tn), lambda j: (0, j)),
        ),
        compiler_params=pltpu.CompilerParams(
            # Every grid step is independent (h1/h2 recomputed per step), so
            # the fc3 column axis can be sharded across TensorCores on v7x.
            dimension_semantics=("parallel",),
            vmem_limit_bytes=32 * 1024 * 1024,
        ),
    )(xp, w1p, b1p, w2p, b2p, w3t, b3p)

    return out_padded[:B, :out3]


def init_params(key, vertex_num):
    """Deterministic parameter init mirroring MyNet.__init__ shapes.

    fc1/fc2: kaiming_normal (std = sqrt(2 / fan_in)), zero bias.
    fc3: weight = pca_pri.t()  (pca_pri has shape (226, vertex_num*9)),
         zero bias.  pca_pri is synthesized deterministically here.
    Weights are stored as (in, out) = PyTorch weight transposed so the kernel
    computes x @ W + b.
    """
    k1, k2, k3 = jax.random.split(key, 3)
    out3 = vertex_num * 9

    w1 = jax.random.normal(k1, (IN_DIM, HID_DIM), jnp.float32) * jnp.sqrt(2.0 / IN_DIM)
    b1 = jnp.zeros((HID_DIM,), jnp.float32)

    w2 = jax.random.normal(k2, (HID_DIM, HID_DIM), jnp.float32) * jnp.sqrt(2.0 / HID_DIM)
    b2 = jnp.zeros((HID_DIM,), jnp.float32)

    # pca_pri: (226, vertex_num*9); PyTorch sets fc3.weight = pca_pri.t(),
    # so the effective (in, out) weight for x @ W is pca_pri itself.
    pca_pri = jax.random.normal(k3, (HID_DIM, out3), jnp.float32) * 0.01
    w3 = pca_pri
    b3 = jnp.zeros((out3,), jnp.float32)

    return w1, b1, w2, b2, w3, b3


def mynet_ref(x, w1, b1, w2, b2, w3, b3):
    """Pure-JAX reference mimicking the kernel's bf16 input / f32 accum rounding."""
    f32 = lambda a: a.astype(jnp.bfloat16).astype(jnp.float32)
    h1 = jnp.maximum(f32(x) @ f32(w1) + b1, 0.0)
    h2 = f32(h1) @ f32(w2) + b2
    return f32(h2) @ f32(w3) + b3


if __name__ == "__main__":
    key = jax.random.PRNGKey(0)
    kx, kp1, kp2 = jax.random.split(key, 3)
    batch = 8
    x = jax.random.normal(kx, (batch, IN_DIM), jnp.float32)

    # Test 1: small fc3 (vertex_num=16 -> out3=144), single-tile grid.
    vertex_num = 16
    params = init_params(kp1, vertex_num)
    out = jax.block_until_ready(mynet_forward(x, *params))
    ref = mynet_ref(x, *params)
    assert out.shape == (batch, vertex_num * 9)
    assert jnp.allclose(out, ref, atol=1e-2, rtol=1e-2)

    # Test 2: exercise the multi-tile streamed fc3 path (tn capped at 256 ->
    # several grid steps, each an independent "parallel" column tile).
    vertex_num2 = 60                          # out3 = 540 -> padded 768 = 3 tiles
    params2 = init_params(kp2, vertex_num2)
    out2 = jax.block_until_ready(mynet_forward(x, *params2, tn_max=256))
    ref2 = mynet_ref(x, *params2)
    assert out2.shape == (batch, vertex_num2 * 9)
    assert jnp.allclose(out2, ref2, atol=1e-2, rtol=1e-2)

    print("KERNEL_OK")
</pallas_src>

<mosaic_0001>
module attributes {stable_mosaic.version = 11 : i64} {
  func.func @mynet_kernel(%arg0: i32, %arg1: memref<8x128xbf16, #tpu.memory_space<vmem>>, %arg2: memref<128x256xbf16, #tpu.memory_space<vmem>>, %arg3: memref<1x256xf32, #tpu.memory_space<vmem>>, %arg4: memref<256x256xbf16, #tpu.memory_space<vmem>>, %arg5: memref<1x256xf32, #tpu.memory_space<vmem>>, %arg6: memref<1x256x256xbf16, #tpu.memory_space<vmem>>, %arg7: memref<1x256xf32, #tpu.memory_space<vmem>>, %arg8: memref<8x256xf32, #tpu.memory_space<vmem>>) attributes {dimension_semantics = [#tpu.dimension_semantics<parallel>], iteration_bounds = array<i64: 1>, scalar_prefetch = 0 : i64, scratch_operands = 0 : i64, tpu.core_type = #tpu.core_type<tc>, window_params = [{pipeline_mode = #tpu.pipeline_mode<synchronous>, transform_indices = @transform_0, window_bounds = array<i64: 8, 128>}, {pipeline_mode = #tpu.pipeline_mode<synchronous>, transform_indices = @transform_1, window_bounds = array<i64: 128, 256>}, {pipeline_mode = #tpu.pipeline_mode<synchronous>, transform_indices = @transform_2, window_bounds = array<i64: 1, 256>}, {pipeline_mode = #tpu.pipeline_mode<synchronous>, transform_indices = @transform_3, window_bounds = array<i64: 256, 256>}, {pipeline_mode = #tpu.pipeline_mode<synchronous>, transform_indices = @transform_4, window_bounds = array<i64: 1, 256>}, {transform_indices = @transform_5, window_bounds = array<i64: 1, 256, 256>}, {transform_indices = @transform_6, window_bounds = array<i64: 1, 256>}, {transform_indices = @transform_7, window_bounds = array<i64: 8, 256>}]} {
    %c0 = arith.constant 0 : index
    %c0_0 = arith.constant 0 : index
    %0 = vector.load %arg1[%c0, %c0_0] : memref<8x128xbf16, #tpu.memory_space<vmem>>, vector<8x128xbf16>
    %c0_1 = arith.constant 0 : index
    %c0_2 = arith.constant 0 : index
    %1 = vector.load %arg2[%c0_1, %c0_2] : memref<128x256xbf16, #tpu.memory_space<vmem>>, vector<128x256xbf16>
    %cst = arith.constant dense<0.000000e+00> : vector<8x256xf32>
    %2 = tpu.matmul %0, %1, %cst {dimension_numbers = #tpu.dot_dimension_numbers<[1], [0], [0], [1], [0, 0, 1, 1], [], []>} : vector<8x128xbf16>, vector<128x256xbf16>, vector<8x256xf32> -> vector<8x256xf32>
    %c0_3 = arith.constant 0 : index
    %c0_4 = arith.constant 0 : index
    %3 = vector.load %arg3[%c0_3, %c0_4] : memref<1x256xf32, #tpu.memory_space<vmem>>, vector<1x256xf32>
    %4 = vector.broadcast %3 : vector<1x256xf32> to vector<8x256xf32>
    %5 = arith.addf %2, %4 : vector<8x256xf32>
    %cst_5 = arith.constant 0.000000e+00 : f32
    %6 = vector.broadcast %cst_5 : f32 to vector<8x256xf32>
    %7 = arith.maximumf %5, %6 : vector<8x256xf32>
    %8 = arith.truncf %7 : vector<8x256xf32> to vector<8x256xbf16>
    %c0_6 = arith.constant 0 : index
    %c0_7 = arith.constant 0 : index
    %9 = vector.load %arg4[%c0_6, %c0_7] : memref<256x256xbf16, #tpu.memory_space<vmem>>, vector<256x256xbf16>
    %cst_8 = arith.constant dense<0.000000e+00> : vector<8x256xf32>
    %10 = tpu.matmul %8, %9, %cst_8 {dimension_numbers = #tpu.dot_dimension_numbers<[1], [0], [0], [1], [0, 0, 1, 1], [], []>} : vector<8x256xbf16>, vector<256x256xbf16>, vector<8x256xf32> -> vector<8x256xf32>
    %c0_9 = arith.constant 0 : index
    %c0_10 = arith.constant 0 : index
    %11 = vector.load %arg5[%c0_9, %c0_10] : memref<1x256xf32, #tpu.memory_space<vmem>>, vector<1x256xf32>
    %12 = vector.broadcast %11 : vector<1x256xf32> to vector<8x256xf32>
    %13 = arith.addf %10, %12 : vector<8x256xf32>
    %14 = arith.truncf %13 : vector<8x256xf32> to vector<8x256xbf16>
    %c0_11 = arith.constant 0 : index
    %c0_12 = arith.constant 0 : index
    %c0_13 = arith.constant 0 : index
    %15 = vector.load %arg6[%c0_11, %c0_12, %c0_13] : memref<1x256x256xbf16, #tpu.memory_space<vmem>>, vector<1x256x256xbf16>
    %16 = vector.shape_cast %15 : vector<1x256x256xbf16> to vector<256x256xbf16>
    %cst_14 = arith.constant dense<0.000000e+00> : vector<8x256xf32>
    %17 = tpu.matmul %14, %16, %cst_14 {dimension_numbers = #tpu.dot_dimension_numbers<[1], [0], [0], [1], [0, 0, 1, 1], [], []>} : vector<8x256xbf16>, vector<256x256xbf16>, vector<8x256xf32> -> vector<8x256xf32>
    %c0_15 = arith.constant 0 : index
    %c0_16 = arith.constant 0 : index
    %18 = vector.load %arg7[%c0_15, %c0_16] : memref<1x256xf32, #tpu.memory_space<vmem>>, vector<1x256xf32>
    %19 = vector.broadcast %18 : vector<1x256xf32> to vector<8x256xf32>
    %20 = arith.addf %17, %19 : vector<8x256xf32>
    %c0_17 = arith.constant 0 : index
    %c0_18 = arith.constant 0 : index
    %21 = vector.load %arg8[%c0_17, %c0_18] : memref<8x256xf32, #tpu.memory_space<vmem>>, vector<8x256xf32>
    tpu.vector_store %arg8[%c0_17, %c0_18], %20 {strides = array<i32>} : memref<8x256xf32, #tpu.memory_space<vmem>>, vector<8x256xf32>,
    return
  }
  func.func @transform_0(%arg0: i32) -> (i32, i32) {
    %c0_i32 = arith.constant 0 : i32
    %c0_i32_0 = arith.constant 0 : i32
    %c0_i32_1 = arith.constant 0 : i32
    return %c0_i32, %c0_i32_0 : i32, i32
  }
  func.func @transform_1(%arg0: i32) -> (i32, i32) {
    %c0_i32 = arith.constant 0 : i32
    %c0_i32_0 = arith.constant 0 : i32
    %c0_i32_1 = arith.constant 0 : i32
    return %c0_i32, %c0_i32_0 : i32, i32
  }
  func.func @transform_2(%arg0: i32) -> (i32, i32) {
    %c0_i32 = arith.constant 0 : i32
    %c0_i32_0 = arith.constant 0 : i32
    %c0_i32_1 = arith.constant 0 : i32
    return %c0_i32, %c0_i32_0 : i32, i32
  }
  func.func @transform_3(%arg0: i32) -> (i32, i32) {
    %c0_i32 = arith.constant 0 : i32
    %c0_i32_0 = arith.constant 0 : i32
    %c0_i32_1 = arith.constant 0 : i32
    return %c0_i32, %c0_i32_0 : i32, i32
  }
  func.func @transform_4(%arg0: i32) -> (i32, i32) {
    %c0_i32 = arith.constant 0 : i32
    %c0_i32_0 = arith.constant 0 : i32
    %c0_i32_1 = arith.constant 0 : i32
    return %c0_i32, %c0_i32_0 : i32, i32
  }
  func.func @transform_5(%arg0: i32) -> (i32, i32, i32) {
    %c0_i32 = arith.constant 0 : i32
    %c0_i32_0 = arith.constant 0 : i32
    %c0_i32_1 = arith.constant 0 : i32
    return %arg0, %c0_i32, %c0_i32_0 : i32, i32, i32
  }
  func.func @transform_6(%arg0: i32) -> (i32, i32) {
    %c0_i32 = arith.constant 0 : i32
    %c0_i32_0 = arith.constant 0 : i32
    return %c0_i32, %arg0 : i32, i32
  }
  func.func @transform_7(%arg0: i32) -> (i32, i32) {
    %c0_i32 = arith.constant 0 : i32
    %c0_i32_0 = arith.constant 0 : i32
    return %c0_i32, %arg0 : i32, i32
  }
}

</mosaic_0001>

<llo_original>
// kernel: tpu_custom_call.1
$region0: #{tpu_custom_call.1}
  #allocation0 [shape = 'u32[]', space=smem, size = 0x4, offset = 0x4, fixed_abs, tag = 'smem constant byte address 0x4 - core index']
  #allocation1 [shape = 'u32[144,128]{1,0:T(1,128)}', space=vmem, size = 0x12000, scoped, tag = 'internal scratch']
  %s0 = inlined_call_operand.hbm [shape: bf16[8,128], index: 0, kind: input, shape index: {}]
  %s1 = inlined_call_operand.hbm [shape: bf16[128,256], index: 1, kind: input, shape index: {}]
  %s2 = inlined_call_operand.vmem [shape: f32[1,256], index: 2, kind: input, shape index: {}]
  %s3 = inlined_call_operand.hbm [shape: bf16[256,256], index: 3, kind: input, shape index: {}]
  %s4 = inlined_call_operand.vmem [shape: f32[1,256], index: 4, kind: input, shape index: {}]
  %s5 = inlined_call_operand.hbm [shape: bf16[1,256,256], index: 5, kind: input, shape index: {}]
  %s6 = inlined_call_operand.vmem [shape: f32[1,256], index: 6, kind: input, shape index: {}]
  %s7 = inlined_call_operand.hbm [shape: f32[8,256], index: 7, kind: output, shape index: {}]
  %s8 = sld [smem:[#allocation0]]
  $region54: #{tpu_custom_call.1} parent=0
    _
  %s10 = ssub.s32 1, %s8
  %s11 = scalar_select 0, %s10, %s8
  $region1: #{tpu_custom_call.1} parent=0
    #allocation2 [shape = 'u8[2048]{0}', space=vmem, size = 0x800, scoped, tag = 'input window, operand 0, single buffered']
    #allocation3 [shape = 's32[1]{0}', space=sflag, size = 0x4, scoped, tag = 'scoped memory for tpu_custom_call.1']
    #allocation4 [shape = 's32[1]{0}', space=sflag, size = 0x4, scoped, tag = 'scoped memory for tpu_custom_call.1']
    #allocation5 [shape = 'u8[65536]{0}', space=vmem, size = 0x10000, scoped, tag = 'input window, operand 1, single buffered']
    #allocation6 [shape = 's32[1]{0}', space=sflag, size = 0x4, scoped, tag = 'scoped memory for tpu_custom_call.1']
    #allocation7 [shape = 'u8[131072]{0}', space=vmem, size = 0x20000, scoped, tag = 'input window, operand 3, single buffered']
    #allocation8 [shape = 'u8[131072]{0}', space=vmem, size = 0x20000, scoped, tag = 'input window, operand 5, single buffered']
    #allocation9 [shape = 's32[1]{0}', space=sflag, size = 0x4, scoped, tag = 'scoped memory for tpu_custom_call.1']
    #allocation10 [shape = 'u8[8192]{0}', space=vmem, size = 0x2000, scoped, tag = 'output window, operand 0, single buffered']
    %12 = vsyncpa [#allocation3], 0
    %13 = vsyncpa [#allocation6], 0
    %14 = vsyncpa [#allocation9], 0
    %15 = vsyncpa [#allocation4], 0
    // Predicated region
    $region2: #{tpu_custom_call.1} parent=1 // pred_check
      _
    $region3: #{tpu_custom_call.1} parent=1 // pred_check_branch
      %17 = sbr.rel (0) target = $region5
    $region4: #{tpu_custom_call.1} parent=1 // pred_region
      %s19 = ssub.s32 64, 64
      %20 = vsyncadd [#allocation3], %s19
      %s22 = sshll.u32 [#allocation2], 4
      %s23 = int_to_ptr.vmem [resolvable:$true] %s22
      %25 = dma.hbm_to_vmem [thread:$0]  %s0, 64, %s23, [#allocation3]
    $region5: #{tpu_custom_call.1} parent=1 // pred_fallthru
      _
    // Predicated region
    $region6: #{tpu_custom_call.1} parent=1 // pred_check
      _
    $region7: #{tpu_custom_call.1} parent=1 // pred_check_branch
      %27 = sbr.rel (0) target = $region9
    $region8: #{tpu_custom_call.1} parent=1 // pred_region
      %s29 = ssub.s32 2048, 2048
      %30 = vsyncadd [#allocation6], %s29
      %s31 = sshll.u32 [#allocation5], 4
      %s32 = int_to_ptr.vmem [resolvable:$true] %s31
      %37 = dma.hbm_to_vmem [thread:$0]  %s1, 2048, %s32, [#allocation6], 128, 128, 8
    $region9: #{tpu_custom_call.1} parent=1 // pred_fallthru
      _
    // Predicated region
    $region10: #{tpu_custom_call.1} parent=1 // pred_check
      _
    $region11: #{tpu_custom_call.1} parent=1 // pred_check_branch
      %39 = sbr.rel (0) target = $region13
    $region12: #{tpu_custom_call.1} parent=1 // pred_region
      _
    $region13: #{tpu_custom_call.1} parent=1 // pred_fallthru
      _
    // Predicated region
    $region14: #{tpu_custom_call.1} parent=1 // pred_check
      _
    $region15: #{tpu_custom_call.1} parent=1 // pred_check_branch
      %41 = sbr.rel (0) target = $region17
    $region16: #{tpu_custom_call.1} parent=1 // pred_region
      %s43 = ssub.s32 4096, 4096
      %44 = vsyncadd [#allocation6], %s43
      %s45 = sshll.u32 [#allocation7], 4
      %s46 = int_to_ptr.vmem [resolvable:$true] %s45
      %51 = dma.hbm_to_vmem [thread:$0]  %s3, 4096, %s46, [#allocation6], 128, 128, 8
    $region17: #{tpu_custom_call.1} parent=1 // pred_fallthru
      _
    // Predicated region
    $region18: #{tpu_custom_call.1} parent=1 // pred_check
      _
    $region19: #{tpu_custom_call.1} parent=1 // pred_check_branch
      %53 = sbr.rel (0) target = $region21
    $region20: #{tpu_custom_call.1} parent=1 // pred_region
      _
    $region21: #{tpu_custom_call.1} parent=1 // pred_fallthru
      _
    // Predicated region
    $region22: #{tpu_custom_call.1} parent=1 // pred_check
      _
    $region23: #{tpu_custom_call.1} parent=1 // pred_check_branch
      %55 = sbr.rel (0) target = $region25
    $region24: #{tpu_custom_call.1} parent=1 // pred_region
      %s57 = ssub.s32 4096, 4096
      %58 = vsyncadd [#allocation9], %s57
      %s59 = sshll.u32 [#allocation8], 4
      %s60 = int_to_ptr.vmem [resolvable:$true] %s59
      %65 = dma.hbm_to_vmem [thread:$0]  %s5, 4096, %s60, [#allocation9], 128, 128, 8
    $region25: #{tpu_custom_call.1} parent=1 // pred_fallthru
      _
    // Predicated region
    $region26: #{tpu_custom_call.1} parent=1 // pred_check
      _
    $region27: #{tpu_custom_call.1} parent=1 // pred_check_branch
      %67 = sbr.rel (0) target = $region29
    $region28: #{tpu_custom_call.1} parent=1 // pred_region
      _
    $region29: #{tpu_custom_call.1} parent=1 // pred_fallthru
      _
    // Predicated region
    $region30: #{tpu_custom_call.1} parent=1 // pred_check
      _
    $region31: #{tpu_custom_call.1} parent=1 // pred_check_branch
      %69 = sbr.rel (0) target = $region33
    $region32: #{tpu_custom_call.1} parent=1 // pred_region
      %70 = dma.done [#allocation3], 64
    $region33: #{tpu_custom_call.1} parent=1 // pred_fallthru
      _
    // Predicated region
    $region34: #{tpu_custom_call.1} parent=1 // pred_check
      _
    $region35: #{tpu_custom_call.1} parent=1 // pred_check_branch
      %72 = sbr.rel (0) target = $region37
    $region36: #{tpu_custom_call.1} parent=1 // pred_region
      %73 = dma.done [#allocation6], 2048
    $region37: #{tpu_custom_call.1} parent=1 // pred_fallthru
      _
    // Predicated region
    $region38: #{tpu_custom_call.1} parent=1 // pred_check
      _
    $region39: #{tpu_custom_call.1} parent=1 // pred_check_branch
      %75 = sbr.rel (0) target = $region41
    $region40: #{tpu_custom_call.1} parent=1 // pred_region
      %76 = dma.done [#allocation6], 4096
    $region41: #{tpu_custom_call.1} parent=1 // pred_fallthru
      _
    // Predicated region
    $region42: #{tpu_custom_call.1} parent=1 // pred_check
      _
    $region43: #{tpu_custom_call.1} parent=1 // pred_check_branch
      %78 = sbr.rel (0) target = $region45
    $region44: #{tpu_custom_call.1} parent=1 // pred_region
      %79 = dma.done [#allocation9], 4096
    $region45: #{tpu_custom_call.1} parent=1 // pred_fallthru
      _
    %v81 = vld [vmem:[#allocation2] sm:$0xf]
    %v82 = vld [vmem:[#allocation5] sm:$0xff]
    %v83 = vld [vmem:[#allocation5 + $0x8] sm:$0xff]
    %v84 = vld [vmem:[#allocation5 + $0x10] sm:$0xff]
    %v85 = vld [vmem:[#allocation5 + $0x18] sm:$0xff]
    %v86 = vld [vmem:[#allocation5 + $0x20] sm:$0xff]
    %v87 = vld [vmem:[#allocation5 + $0x28] sm:$0xff]
    %v88 = vld [vmem:[#allocation5 + $0x30] sm:$0xff]
    %v89 = vld [vmem:[#allocation5 + $0x38] sm:$0xff]
    %v90 = vld [vmem:[#allocation5 + $0x40] sm:$0xff]
    %v91 = vld [vmem:[#allocation5 + $0x48] sm:$0xff]
    %v92 = vld [vmem:[#allocation5 + $0x50] sm:$0xff]
    %v93 = vld [vmem:[#allocation5 + $0x58] sm:$0xff]
    %v94 = vld [vmem:[#allocation5 + $0x60] sm:$0xff]
    %v95 = vld [vmem:[#allocation5 + $0x68] sm:$0xff]
    %v96 = vld [vmem:[#allocation5 + $0x70] sm:$0xff]
    %v97 = vld [vmem:[#allocation5 + $0x78] sm:$0xff]
    %v98 = vld [vmem:[%s2] sm:$0x3]
    %v100 = vlaneseq
    %v101 = vshrl.u32 %v100, 7
    %v102 = vsub.s32 0, %v101
    %v103 = vrot.slane %v98, %v102
    %v104 = vlaneseq
    %v105 = vshrl.u32 %v104, 7
    %v106 = vsub.s32 1, %v105
    %v107 = vrot.slane %v98, %v106
    %v126 = vunpack.c.l.b16 %v82
    %v127 = vunpack.c.h.b16 %v82
    %v128 = vunpack.c.l.b16 %v83
    %v129 = vunpack.c.h.b16 %v83
    %v130 = vunpack.c.l.b16 %v84
    %v131 = vunpack.c.h.b16 %v84
    %v132 = vunpack.c.l.b16 %v85
    %v133 = vunpack.c.h.b16 %v85
    %v134 = vunpack.c.l.b16 %v86
    %v135 = vunpack.c.h.b16 %v86
    %v136 = vunpack.c.l.b16 %v87
    %v137 = vunpack.c.h.b16 %v87
    %v138 = vunpack.c.l.b16 %v88
    %v139 = vunpack.c.h.b16 %v88
    %v140 = vunpack.c.l.b16 %v89
    %v141 = vunpack.c.h.b16 %v89
    %v142 = vunpack.c.l.b16 %v90
    %v143 = vunpack.c.h.b16 %v90
    %v144 = vunpack.c.l.b16 %v91
    %v145 = vunpack.c.h.b16 %v91
    %v146 = vunpack.c.l.b16 %v92
    %v147 = vunpack.c.h.b16 %v92
    %v148 = vunpack.c.l.b16 %v93
    %v149 = vunpack.c.h.b16 %v93
    %v150 = vunpack.c.l.b16 %v94
    %v151 = vunpack.c.h.b16 %v94
    %v152 = vunpack.c.l.b16 %v95
    %v153 = vunpack.c.h.b16 %v95
    %v154 = vunpack.c.l.b16 %v96
    %v155 = vunpack.c.h.b16 %v96
    %v156 = vunpack.c.l.b16 %v97
    %v157 = vunpack.c.h.b16 %v97
    %v158 = vpack.c.b16 %v128, %v126
    %v159 = vpack.c.b16 %v129, %v127
    %v160 = vpack.c.b16 %v132, %v130
    %v161 = vpack.c.b16 %v133, %v131
    %v162 = vpack.c.b16 %v136, %v134
    %v163 = vpack.c.b16 %v137, %v135
    %v164 = vpack.c.b16 %v140, %v138
    %v165 = vpack.c.b16 %v141, %v139
    %v166 = vpack.c.b16 %v144, %v142
    %v167 = vpack.c.b16 %v145, %v143
    %v168 = vpack.c.b16 %v148, %v146
    %v169 = vpack.c.b16 %v149, %v147
    %v170 = vpack.c.b16 %v152, %v150
    %v171 = vpack.c.b16 %v153, %v151
    %v172 = vpack.c.b16 %v156, %v154
    %v173 = vpack.c.b16 %v157, %v155
    %190 = vmatprep.subr.bf16.mxu0 %v159
    %191 = vmatpush1.bf16.msra.mxu0 %v158
    %192 = vmatprep.subr.bf16.mxu0 %v161
    %193 = vmatpush1.bf16.msra.mxu0 %v160
    %194 = vmatprep.subr.bf16.mxu0 %v163
    %195 = vmatpush1.bf16.msra.mxu0 %v162
    %196 = vmatprep.subr.bf16.mxu0 %v165
    %197 = vmatpush1.bf16.msra.mxu0 %v164
    %198 = vmatprep.subr.bf16.mxu0 %v167
    %199 = vmatpush1.bf16.msra.mxu0 %v166
    %200 = vmatprep.subr.bf16.mxu0 %v169
    %201 = vmatpush1.bf16.msra.mxu0 %v168
    %202 = vmatprep.subr.bf16.mxu0 %v171
    %203 = vmatpush1.bf16.msra.mxu0 %v170
    %204 = vmatprep.subr.bf16.mxu0 %v173
    %205 = vmatpush1.bf16.msra.mxu0 %v172
    %206 = vmatprep.subr.bf16.mxu0 0
    %207 = vmatpush1.bf16.msra.mxu0 0
    %208 = vmatprep.subr.bf16.mxu0 0
    %209 = vmatpush1.bf16.msra.mxu0 0
    %210 = vmatprep.subr.bf16.mxu0 0
    %211 = vmatpush1.bf16.msra.mxu0 0
    %212 = vmatprep.subr.bf16.mxu0 0
    %213 = vmatpush1.bf16.msra.mxu0 0
    %214 = vmatprep.subr.bf16.mxu0 0
    %215 = vmatpush1.bf16.msra.mxu0 0
    %216 = vmatprep.subr.bf16.mxu0 0
    %217 = vmatpush1.bf16.msra.mxu0 0
    %218 = vmatprep.subr.bf16.mxu0 0
    %219 = vmatpush1.bf16.msra.mxu0 0
    %220 = vmatprep.subr.bf16.mxu0 0
    %221 = vmatpush1.bf16.msra.mxu0 0
    %222 = vmatprep.mubr.bf16.mxu0 0
    %223 = vmatmul.mubr.bf16.gmra.mrb[0].mxu0 %v81
    %v224 = vpop.f32.mrb[0].mxu0
    %v225 = vadd.f32 %v103, %v224
    %v226 = vpop.f32.mrb[0].mxu0
    %v227 = vadd.f32 %v107, %v226
    %v228 = vpop.f32.mrb[0].mxu0
    %v229 = vpop.f32.mrb[0].mxu0
    %230 = vdwg.mxu0
    %v231 = vmax.f32 %v225, 0.0
    %v232 = vmax.f32 %v227, 0.0
    %v233 = vpack.c.bf16 %v231, %v231
    %v234 = vpack.c.bf16 %v232, %v232
    %v235 = vld [vmem:[#allocation7] sm:$0xff]
    %v236 = vld [vmem:[#allocation7 + $0x8] sm:$0xff]
    %v237 = vld [vmem:[#allocation7 + $0x10] sm:$0xff]
    %v238 = vld [vmem:[#allocation7 + $0x18] sm:$0xff]
    %v239 = vld [vmem:[#allocation7 + $0x20] sm:$0xff]
    %v240 = vld [vmem:[#allocation7 + $0x28] sm:$0xff]
    %v241 = vld [vmem:[#allocation7 + $0x30] sm:$0xff]
    %v242 = vld [vmem:[#allocation7 + $0x38] sm:$0xff]
    %v243 = vld [vmem:[#allocation7 + $0x40] sm:$0xff]
    %v244 = vld [vmem:[#allocation7 + $0x48] sm:$0xff]
    %v245 = vld [vmem:[#allocation7 + $0x50] sm:$0xff]
    %v246 = vld [vmem:[#allocation7 + $0x58] sm:$0xff]
    %v247 = vld [vmem:[#allocation7 + $0x60] sm:$0xff]
    %v248 = vld [vmem:[#allocation7 + $0x68] sm:$0xff]
    %v249 = vld [vmem:[#allocation7 + $0x70] sm:$0xff]
    %v250 = vld [vmem:[#allocation7 + $0x78] sm:$0xff]
    %v251 = vld [vmem:[#allocation7 + $0x80] sm:$0xff]
    %v252 = vld [vmem:[#allocation7 + $0x88] sm:$0xff]
    %v253 = vld [vmem:[#allocation7 + $0x90] sm:$0xff]
    %v254 = vld [vmem:[#allocation7 + $0x98] sm:$0xff]
    %v255 = vld [vmem:[#allocation7 + $0xa0] sm:$0xff]
    %v256 = vld [vmem:[#allocation7 + $0xa8] sm:$0xff]
    %v257 = vld [vmem:[#allocation7 + $0xb0] sm:$0xff]
    %v258 = vld [vmem:[#allocation7 + $0xb8] sm:$0xff]
    %v259 = vld [vmem:[#allocation7 + $0xc0] sm:$0xff]
    %v260 = vld [vmem:[#allocation7 + $0xc8] sm:$0xff]
    %v261 = vld [vmem:[#allocation7 + $0xd0] sm:$0xff]
    %v262 = vld [vmem:[#allocation7 + $0xd8] sm:$0xff]
    %v263 = vld [vmem:[#allocation7 + $0xe0] sm:$0xff]
    %v264 = vld [vmem:[#allocation7 + $0xe8] sm:$0xff]
    %v265 = vld [vmem:[#allocation7 + $0xf0] sm:$0xff]
    %v266 = vld [vmem:[#allocation7 + $0xf8] sm:$0xff]
    %v267 = vld [vmem:[%s4] sm:$0x3]
    %v269 = vlaneseq
    %v270 = vshrl.u32 %v269, 7
    %v271 = vsub.s32 0, %v270
    %v272 = vrot.slane %v267, %v271
    %v273 = vlaneseq
    %v274 = vshrl.u32 %v273, 7
    %v275 = vsub.s32 1, %v274
    %v276 = vrot.slane %v267, %v275
    %v311 = vunpack.c.l.b16 %v235
    %v312 = vunpack.c.h.b16 %v235
    %v313 = vunpack.c.l.b16 %v236
    %v314 = vunpack.c.h.b16 %v236
    %v315 = vunpack.c.l.b16 %v237
    %v316 = vunpack.c.h.b16 %v237
    %v317 = vunpack.c.l.b16 %v238
    %v318 = vunpack.c.h.b16 %v238
    %v319 = vunpack.c.l.b16 %v239
    %v320 = vunpack.c.h.b16 %v239
    %v321 = vunpack.c.l.b16 %v240
    %v322 = vunpack.c.h.b16 %v240
    %v323 = vunpack.c.l.b16 %v241
    %v324 = vunpack.c.h.b16 %v241
    %v325 = vunpack.c.l.b16 %v242
    %v326 = vunpack.c.h.b16 %v242
    %v327 = vunpack.c.l.b16 %v243
    %v328 = vunpack.c.h.b16 %v243
    %v329 = vunpack.c.l.b16 %v244
    %v330 = vunpack.c.h.b16 %v244
    %v331 = vunpack.c.l.b16 %v245
    %v332 = vunpack.c.h.b16 %v245
    %v333 = vunpack.c.l.b16 %v246
    %v334 = vunpack.c.h.b16 %v246
    %v335 = vunpack.c.l.b16 %v247
    %v336 = vunpack.c.h.b16 %v247
    %v337 = vunpack.c.l.b16 %v248
    %v338 = vunpack.c.h.b16 %v248
    %v339 = vunpack.c.l.b16 %v249
    %v340 = vunpack.c.h.b16 %v249
    %v341 = vunpack.c.l.b16 %v250
    %v342 = vunpack.c.h.b16 %v250
    %v343 = vunpack.c.l.b16 %v251
    %v344 = vunpack.c.h.b16 %v251
    %v345 = vunpack.c.l.b16 %v252
    %v346 = vunpack.c.h.b16 %v252
    %v347 = vunpack.c.l.b16 %v253
    %v348 = vunpack.c.h.b16 %v253
    %v349 = vunpack.c.l.b16 %v254
    %v350 = vunpack.c.h.b16 %v254
    %v351 = vunpack.c.l.b16 %v255
    %v352 = vunpack.c.h.b16 %v255
    %v353 = vunpack.c.l.b16 %v256
    %v354 = vunpack.c.h.b16 %v256
    %v355 = vunpack.c.l.b16 %v257
    %v356 = vunpack.c.h.b16 %v257
    %v357 = vunpack.c.l.b16 %v258
    %v358 = vunpack.c.h.b16 %v258
    %v359 = vunpack.c.l.b16 %v259
    %v360 = vunpack.c.h.b16 %v259
    %v361 = vunpack.c.l.b16 %v260
    %v362 = vunpack.c.h.b16 %v260
    %v363 = vunpack.c.l.b16 %v261
    %v364 = vunpack.c.h.b16 %v261
    %v365 = vunpack.c.l.b16 %v262
    %v366 = vunpack.c.h.b16 %v262
    %v367 = vunpack.c.l.b16 %v263
    %v368 = vunpack.c.h.b16 %v263
    %v369 = vunpack.c.l.b16 %v264
    %v370 = vunpack.c.h.b16 %v264
    %v371 = vunpack.c.l.b16 %v265
    %v372 = vunpack.c.h.b16 %v265
    %v373 = vunpack.c.l.b16 %v266
    %v374 = vunpack.c.h.b16 %v266
    %v375 = vpack.c.b16 %v313, %v311
    %v376 = vpack.c.b16 %v314, %v312
    %v377 = vpack.c.b16 %v317, %v315
    %v378 = vpack.c.b16 %v318, %v316
    %v379 = vpack.c.b16 %v321, %v319
    %v380 = vpack.c.b16 %v322, %v320
    %v381 = vpack.c.b16 %v325, %v323
    %v382 = vpack.c.b16 %v326, %v324
    %v383 = vpack.c.b16 %v329, %v327
    %v384 = vpack.c.b16 %v330, %v328
    %v385 = vpack.c.b16 %v333, %v331
    %v386 = vpack.c.b16 %v334, %v332
    %v387 = vpack.c.b16 %v337, %v335
    %v388 = vpack.c.b16 %v338, %v336
    %v389 = vpack.c.b16 %v341, %v339
    %v390 = vpack.c.b16 %v342, %v340
    %v391 = vpack.c.b16 %v345, %v343
    %v392 = vpack.c.b16 %v346, %v344
    %v393 = vpack.c.b16 %v349, %v347
    %v394 = vpack.c.b16 %v350, %v348
    %v395 = vpack.c.b16 %v353, %v351
    %v396 = vpack.c.b16 %v354, %v352
    %v397 = vpack.c.b16 %v357, %v355
    %v398 = vpack.c.b16 %v358, %v356
    %v399 = vpack.c.b16 %v361, %v359
    %v400 = vpack.c.b16 %v362, %v360
    %v401 = vpack.c.b16 %v365, %v363
    %v402 = vpack.c.b16 %v366, %v364
    %v403 = vpack.c.b16 %v369, %v367
    %v404 = vpack.c.b16 %v370, %v368
    %v405 = vpack.c.b16 %v373, %v371
    %v406 = vpack.c.b16 %v374, %v372
    %439 = vmatprep.subr.bf16.mxu0 %v376
    %440 = vmatpush1.bf16.msra.mxu0 %v375
    %441 = vmatprep.subr.bf16.mxu0 %v378
    %442 = vmatpush1.bf16.msra.mxu0 %v377
    %443 = vmatprep.subr.bf16.mxu0 %v380
    %444 = vmatpush1.bf16.msra.mxu0 %v379
    %445 = vmatprep.subr.bf16.mxu0 %v382
    %446 = vmatpush1.bf16.msra.mxu0 %v381
    %447 = vmatprep.subr.bf16.mxu0 %v384
    %448 = vmatpush1.bf16.msra.mxu0 %v383
    %449 = vmatprep.subr.bf16.mxu0 %v386
    %450 = vmatpush1.bf16.msra.mxu0 %v385
    %451 = vmatprep.subr.bf16.mxu0 %v388
    %452 = vmatpush1.bf16.msra.mxu0 %v387
    %453 = vmatprep.subr.bf16.mxu0 %v390
    %454 = vmatpush1.bf16.msra.mxu0 %v389
    %455 = vmatprep.subr.bf16.mxu0 %v392
    %456 = vmatpush1.bf16.msra.mxu0 %v391
    %457 = vmatprep.subr.bf16.mxu0 %v394
    %458 = vmatpush1.bf16.msra.mxu0 %v393
    %459 = vmatprep.subr.bf16.mxu0 %v396
    %460 = vmatpush1.bf16.msra.mxu0 %v395
    %461 = vmatprep.subr.bf16.mxu0 %v398
    %462 = vmatpush1.bf16.msra.mxu0 %v397
    %463 = vmatprep.subr.bf16.mxu0 %v400
    %464 = vmatpush1.bf16.msra.mxu0 %v399
    %465 = vmatprep.subr.bf16.mxu0 %v402
    %466 = vmatpush1.bf16.msra.mxu0 %v401
    %467 = vmatprep.subr.bf16.mxu0 %v404
    %468 = vmatpush1.bf16.msra.mxu0 %v403
    %469 = vmatprep.subr.bf16.mxu0 %v406
    %470 = vmatpush1.bf16.msra.mxu0 %v405
    %471 = vmatprep.mubr.bf16.mxu0 %v234
    %472 = vmatmul.mubr.bf16.gmra.mrb[0].mxu0 %v233
    %v473 = vpop.f32.mrb[0].mxu0
    %v474 = vadd.f32 %v272, %v473
    %v475 = vpop.f32.mrb[0].mxu0
    %v476 = vadd.f32 %v276, %v475
    %v477 = vpop.f32.mrb[0].mxu0
    %v478 = vpop.f32.mrb[0].mxu0
    %479 = vdwg.mxu0
    %v480 = vpack.c.bf16 %v474, %v474
    %v481 = vpack.c.bf16 %v476, %v476
    %v482 = vld [vmem:[#allocation8] sm:$0xff]
    %v483 = vld [vmem:[#allocation8 + $0x8] sm:$0xff]
    %v484 = vld [vmem:[#allocation8 + $0x10] sm:$0xff]
    %v485 = vld [vmem:[#allocation8 + $0x18] sm:$0xff]
    %v486 = vld [vmem:[#allocation8 + $0x20] sm:$0xff]
    %v487 = vld [vmem:[#allocation8 + $0x28] sm:$0xff]
    %v488 = vld [vmem:[#allocation8 + $0x30] sm:$0xff]
    %v489 = vld [vmem:[#allocation8 + $0x38] sm:$0xff]
    %v490 = vld [vmem:[#allocation8 + $0x40] sm:$0xff]
    %v491 = vld [vmem:[#allocation8 + $0x48] sm:$0xff]
    %v492 = vld [vmem:[#allocation8 + $0x50] sm:$0xff]
    %v493 = vld [vmem:[#allocation8 + $0x58] sm:$0xff]
    %v494 = vld [vmem:[#allocation8 + $0x60] sm:$0xff]
    %v495 = vld [vmem:[#allocation8 + $0x68] sm:$0xff]
    %v496 = vld [vmem:[#allocation8 + $0x70] sm:$0xff]
    %v497 = vld [vmem:[#allocation8 + $0x78] sm:$0xff]
    %v498 = vld [vmem:[#allocation8 + $0x80] sm:$0xff]
    %v499 = vld [vmem:[#allocation8 + $0x88] sm:$0xff]
    %v500 = vld [vmem:[#allocation8 + $0x90] sm:$0xff]
    %v501 = vld [vmem:[#allocation8 + $0x98] sm:$0xff]
    %v502 = vld [vmem:[#allocation8 + $0xa0] sm:$0xff]
    %v503 = vld [vmem:[#allocation8 + $0xa8] sm:$0xff]
    %v504 = vld [vmem:[#allocation8 + $0xb0] sm:$0xff]
    %v505 = vld [vmem:[#allocation8 + $0xb8] sm:$0xff]
    %v506 = vld [vmem:[#allocation8 + $0xc0] sm:$0xff]
    %v507 = vld [vmem:[#allocation8 + $0xc8] sm:$0xff]
    %v508 = vld [vmem:[#allocation8 + $0xd0] sm:$0xff]
    %v509 = vld [vmem:[#allocation8 + $0xd8] sm:$0xff]
    %v510 = vld [vmem:[#allocation8 + $0xe0] sm:$0xff]
    %v511 = vld [vmem:[#allocation8 + $0xe8] sm:$0xff]
    %v512 = vld [vmem:[#allocation8 + $0xf0] sm:$0xff]
    %v513 = vld [vmem:[#allocation8 + $0xf8] sm:$0xff]
    %v514 = vld [vmem:[%s6] sm:$0x3]
    %v516 = vlaneseq
    %v517 = vshrl.u32 %v516, 7
    %v518 = vsub.s32 0, %v517
    %v519 = vrot.slane %v514, %v518
    %v520 = vlaneseq
    %v521 = vshrl.u32 %v520, 7
    %v522 = vsub.s32 1, %v521
    %v523 = vrot.slane %v514, %v522
    %v558 = vunpack.c.l.b16 %v482
    %v559 = vunpack.c.h.b16 %v482
    %v560 = vunpack.c.l.b16 %v483
    %v561 = vunpack.c.h.b16 %v483
    %v562 = vunpack.c.l.b16 %v484
    %v563 = vunpack.c.h.b16 %v484
    %v564 = vunpack.c.l.b16 %v485
    %v565 = vunpack.c.h.b16 %v485
    %v566 = vunpack.c.l.b16 %v486
    %v567 = vunpack.c.h.b16 %v486
    %v568 = vunpack.c.l.b16 %v487
    %v569 = vunpack.c.h.b16 %v487
    %v570 = vunpack.c.l.b16 %v488
    %v571 = vunpack.c.h.b16 %v488
    %v572 = vunpack.c.l.b16 %v489
    %v573 = vunpack.c.h.b16 %v489
    %v574 = vunpack.c.l.b16 %v490
    %v575 = vunpack.c.h.b16 %v490
    %v576 = vunpack.c.l.b16 %v491
    %v577 = vunpack.c.h.b16 %v491
    %v578 = vunpack.c.l.b16 %v492
    %v579 = vunpack.c.h.b16 %v492
    %v580 = vunpack.c.l.b16 %v493
    %v581 = vunpack.c.h.b16 %v493
    %v582 = vunpack.c.l.b16 %v494
    %v583 = vunpack.c.h.b16 %v494
    %v584 = vunpack.c.l.b16 %v495
    %v585 = vunpack.c.h.b16 %v495
    %v586 = vunpack.c.l.b16 %v496
    %v587 = vunpack.c.h.b16 %v496
    %v588 = vunpack.c.l.b16 %v497
    %v589 = vunpack.c.h.b16 %v497
    %v590 = vunpack.c.l.b16 %v498
    %v591 = vunpack.c.h.b16 %v498
    %v592 = vunpack.c.l.b16 %v499
    %v593 = vunpack.c.h.b16 %v499
    %v594 = vunpack.c.l.b16 %v500
    %v595 = vunpack.c.h.b16 %v500
    %v596 = vunpack.c.l.b16 %v501
    %v597 = vunpack.c.h.b16 %v501
    %v598 = vunpack.c.l.b16 %v502
    %v599 = vunpack.c.h.b16 %v502
    %v600 = vunpack.c.l.b16 %v503
    %v601 = vunpack.c.h.b16 %v503
    %v602 = vunpack.c.l.b16 %v504
    %v603 = vunpack.c.h.b16 %v504
    %v604 = vunpack.c.l.b16 %v505
    %v605 = vunpack.c.h.b16 %v505
    %v606 = vunpack.c.l.b16 %v506
    %v607 = vunpack.c.h.b16 %v506
    %v608 = vunpack.c.l.b16 %v507
    %v609 = vunpack.c.h.b16 %v507
    %v610 = vunpack.c.l.b16 %v508
    %v611 = vunpack.c.h.b16 %v508
    %v612 = vunpack.c.l.b16 %v509
    %v613 = vunpack.c.h.b16 %v509
    %v614 = vunpack.c.l.b16 %v510
    %v615 = vunpack.c.h.b16 %v510
    %v616 = vunpack.c.l.b16 %v511
    %v617 = vunpack.c.h.b16 %v511
    %v618 = vunpack.c.l.b16 %v512
    %v619 = vunpack.c.h.b16 %v512
    %v620 = vunpack.c.l.b16 %v513
    %v621 = vunpack.c.h.b16 %v513
    %v622 = vpack.c.b16 %v560, %v558
    %v623 = vpack.c.b16 %v561, %v559
    %v624 = vpack.c.b16 %v564, %v562
    %v625 = vpack.c.b16 %v565, %v563
    %v626 = vpack.c.b16 %v568, %v566
    %v627 = vpack.c.b16 %v569, %v567
    %v628 = vpack.c.b16 %v572, %v570
    %v629 = vpack.c.b16 %v573, %v571
    %v630 = vpack.c.b16 %v576, %v574
    %v631 = vpack.c.b16 %v577, %v575
    %v632 = vpack.c.b16 %v580, %v578
    %v633 = vpack.c.b16 %v581, %v579
    %v634 = vpack.c.b16 %v584, %v582
    %v635 = vpack.c.b16 %v585, %v583
    %v636 = vpack.c.b16 %v588, %v586
    %v637 = vpack.c.b16 %v589, %v587
    %v638 = vpack.c.b16 %v592, %v590
    %v639 = vpack.c.b16 %v593, %v591
    %v640 = vpack.c.b16 %v596, %v594
    %v641 = vpack.c.b16 %v597, %v595
    %v642 = vpack.c.b16 %v600, %v598
    %v643 = vpack.c.b16 %v601, %v599
    %v644 = vpack.c.b16 %v604, %v602
    %v645 = vpack.c.b16 %v605, %v603
    %v646 = vpack.c.b16 %v608, %v606
    %v647 = vpack.c.b16 %v609, %v607
    %v648 = vpack.c.b16 %v612, %v610
    %v649 = vpack.c.b16 %v613, %v611
    %v650 = vpack.c.b16 %v616, %v614
    %v651 = vpack.c.b16 %v617, %v615
    %v652 = vpack.c.b16 %v620, %v618
    %v653 = vpack.c.b16 %v621, %v619
    %686 = vmatprep.subr.bf16.mxu0 %v623
    %687 = vmatpush1.bf16.msra.mxu0 %v622
    %688 = vmatprep.subr.bf16.mxu0 %v625
    %689 = vmatpush1.bf16.msra.mxu0 %v624
    %690 = vmatprep.subr.bf16.mxu0 %v627
    %691 = vmatpush1.bf16.msra.mxu0 %v626
    %692 = vmatprep.subr.bf16.mxu0 %v629
    %693 = vmatpush1.bf16.msra.mxu0 %v628
    %694 = vmatprep.subr.bf16.mxu0 %v631
    %695 = vmatpush1.bf16.msra.mxu0 %v630
    %696 = vmatprep.subr.bf16.mxu0 %v633
    %697 = vmatpush1.bf16.msra.mxu0 %v632
    %698 = vmatprep.subr.bf16.mxu0 %v635
    %699 = vmatpush1.bf16.msra.mxu0 %v634
    %700 = vmatprep.subr.bf16.mxu0 %v637
    %701 = vmatpush1.bf16.msra.mxu0 %v636
    %702 = vmatprep.subr.bf16.mxu0 %v639
    %703 = vmatpush1.bf16.msra.mxu0 %v638
    %704 = vmatprep.subr.bf16.mxu0 %v641
    %705 = vmatpush1.bf16.msra.mxu0 %v640
    %706 = vmatprep.subr.bf16.mxu0 %v643
    %707 = vmatpush1.bf16.msra.mxu0 %v642
    %708 = vmatprep.subr.bf16.mxu0 %v645
    %709 = vmatpush1.bf16.msra.mxu0 %v644
    %710 = vmatprep.subr.bf16.mxu0 %v647
    %711 = vmatpush1.bf16.msra.mxu0 %v646
    %712 = vmatprep.subr.bf16.mxu0 %v649
    %713 = vmatpush1.bf16.msra.mxu0 %v648
    %714 = vmatprep.subr.bf16.mxu0 %v651
    %715 = vmatpush1.bf16.msra.mxu0 %v650
    %716 = vmatprep.subr.bf16.mxu0 %v653
    %717 = vmatpush1.bf16.msra.mxu0 %v652
    %718 = vmatprep.mubr.bf16.mxu0 %v481
    %719 = vmatmul.mubr.bf16.gmra.mrb[0].mxu0 %v480
    %v720 = vpop.f32.mrb[0].mxu0
    %v721 = vadd.f32 %v519, %v720
    %v722 = vpop.f32.mrb[0].mxu0
    %v723 = vadd.f32 %v523, %v722
    %v724 = vpop.f32.mrb[0].mxu0
    %v725 = vpop.f32.mrb[0].mxu0
    %726 = vdwg.mxu0
    %727 = vst [vmem:[#allocation10] sm:$0xff] %v721
    %728 = vst [vmem:[#allocation10 + $0x8] sm:$0xff] %v723
    // Predicated region
    $region46: #{tpu_custom_call.1} parent=1 // pred_check
      _
    $region47: #{tpu_custom_call.1} parent=1 // pred_check_branch
      %730 = sbr.rel (0) target = $region49
    $region48: #{tpu_custom_call.1} parent=1 // pred_region
      %s732 = ssub.s32 256, 256
      %733 = vsyncadd [#allocation4], %s732
      %s735 = sshll.u32 [#allocation10], 4
      %s736 = int_to_ptr.vmem [resolvable:$true] %s735
      %738 = dma.vmem_to_hbm [thread:$0]  %s736, 256, %s7, [#allocation4]
    $region49: #{tpu_custom_call.1} parent=1 // pred_fallthru
      _
    // Predicated region
    $region50: #{tpu_custom_call.1} parent=1 // pred_check
      _
    $region51: #{tpu_custom_call.1} parent=1 // pred_check_branch
      %740 = sbr.rel (0) target = $region53
    $region52: #{tpu_custom_call.1} parent=1 // pred_region
      %741 = dma.done [#allocation4], 256
    $region53: #{tpu_custom_call.1} parent=1 // pred_fallthru
      _
    %742 = vsyncpa [#allocation3], 1
    %743 = vsyncpa [#allocation6], 1
    %744 = vsyncpa [#allocation9], 1
    %745 = vsyncpa [#allocation4], 1

</llo_original>
